<compile_context>
chip_gen: v7x
topology: tpu7x:2x2x1
jax: 0.10.0
libtpu: 0.0.40
codegen_flags: <defaults>
</compile_context>

<pallas_src>
import functools

import jax
import jax.numpy as jnp
from jax.experimental import pallas as pl
from jax.experimental.pallas import tpu as pltpu


def _round_up(v, m):
    return ((v + m - 1) // m) * m


def _cge_kernel(b0_ref, x1_ref,
                w1b_ref, w1x_ref, b1_ref,
                wh_ref, bh_ref,
                mu_ref, logvar_ref):
    cdt = w1b_ref.dtype                      # MXU compute dtype (bf16)
    # In-kernel cast of the f32 activation tiles (VPU slot has slack in this mem-bound kernel).
    b0 = b0_ref[...].astype(cdt)
    x1 = x1_ref[...].astype(cdt)
    # fc1 on concatenated input == split matmul:
    #   concat([b0, x1]) @ W1 = b0 @ W1[:Db] + x1 @ W1[Db:]
    # Accumulate in f32 on the MXU, add f32 bias.
    h = (jnp.dot(b0, w1b_ref[...], preferred_element_type=jnp.float32)
         + jnp.dot(x1, w1x_ref[...], preferred_element_type=jnp.float32)
         + b1_ref[...])
    # Cast before ReLU (equivalent for max(x, 0)); halves the f32 live range of (TB, H).
    h = jnp.maximum(h.astype(cdt), 0)
    # Fused heads: [mu | logvar] in one matmul over the [H, 2*O] weight; split in-VMEM.
    out = jnp.dot(h, wh_ref[...], preferred_element_type=jnp.float32) + bh_ref[...]
    o = mu_ref.shape[-1]
    mu_ref[...] = out[:, :o].astype(mu_ref.dtype)
    logvar_ref[...] = out[:, o:].astype(logvar_ref.dtype)


def prepare_params(params, input_dim_b0, compute_dtype=jnp.bfloat16):
    """One-time parameter preparation (do NOT call per forward pass):
    pre-split w1 for the two input chunks, fuse the mu/logvar heads, reshape biases to 2-D,
    and cast weights to the MXU compute dtype (biases stay f32 for the post-accumulation add)."""
    Db = input_dim_b0
    H = params["w1"].shape[1]
    w1b = params["w1"][:Db].astype(compute_dtype)                         # (Db, H)
    w1x = params["w1"][Db:].astype(compute_dtype)                         # (Dx, H)
    b1 = params["b1"].reshape(1, H).astype(jnp.float32)                   # (1, H)
    w_heads = jnp.concatenate([params["w_mu"], params["w_logvar"]],
                              axis=1).astype(compute_dtype)               # (H, 2*O)
    b_heads = jnp.concatenate([params["b_mu"], params["b_logvar"]],
                              axis=0).reshape(1, -1).astype(jnp.float32)  # (1, 2*O)
    return {"w1b": w1b, "w1x": w1x, "b1": b1,
            "w_heads": w_heads, "b_heads": b_heads}


@functools.partial(jax.jit, static_argnames=("tile_b", "out_dtype"))
def conditional_gaussian_estimator(b0, x1, prepared, *,
                                   tile_b=None,
                                   out_dtype=jnp.float32):
    """Forward pass. `prepared` comes from prepare_params(). Returns (mu, logvar)."""
    B, Db = b0.shape
    _, Dx = x1.shape
    H = prepared["w1b"].shape[1]
    O2 = prepared["w_heads"].shape[1]
    O = O2 // 2

    in_itemsize = jnp.dtype(b0.dtype).itemsize
    out_itemsize = jnp.dtype(out_dtype).itemsize

    # ---- adaptive batch tile -------------------------------------------------------------
    # Per-row HBM traffic, counting lane padding of narrow (<128) feature dims.
    bytes_per_row = ((_round_up(Db, 128) + _round_up(Dx, 128)) * in_itemsize
                     + 2 * _round_up(O, 128) * out_itemsize)
    if tile_b is None:
        # Target >= ~1 MiB moved per grid step so the ~0.35 us per-step overhead is amortized.
        tile_b = _round_up(max(pl.cdiv(1 << 20, bytes_per_row), 256), 8)
    TB = min(tile_b, B)
    # v7x has 2 TensorCores: keep at least 2 (ideally even #) parallel grid steps when B allows.
    if B >= 16:
        TB = min(TB, _round_up(pl.cdiv(B, 2), 8))
    if TB != B and TB % 8 != 0:
        TB = max(8, (TB // 8) * 8)

    # Per-step VMEM footprint: double-buffered act/out tiles + resident weights + f32 temps.
    w_bytes = (((Db + Dx) * H + 2 * H * O) * 2          # bf16 weights
               + (H + 2 * O) * 4)                        # f32 biases
    def _vmem_bytes(tb):
        return (2 * tb * (Db + Dx) * in_itemsize         # double-buffered input tiles
                + 2 * 2 * tb * O * out_itemsize          # double-buffered mu/logvar tiles
                + 2 * w_bytes                            # residents (assume 2 buffers worst case)
                + tb * H * 4 + tb * 2 * O * 4)           # f32 intermediates h / out
    # Stay comfortably inside v7x's 64 MiB (default scoped limit is 32 MiB).
    while TB > 8 and _vmem_bytes(TB) > (24 << 20):
        TB = max(8, ((TB // 2) // 8) * 8)
    TB = max(1, min(TB, B))
    grid = (pl.cdiv(B, TB),)

    # ---- specs ----------------------------------------------------------------------------
    act_spec = lambda d: pl.BlockSpec((TB, d), lambda i: (i, 0))
    # Grid-invariant weights/biases: constant index_map -> fetched once, VMEM-resident.
    # Only when double-buffering the residents would meaningfully eat VMEM (v7x 64 MiB),
    # request single buffering; at small weight sizes keep the default.
    single_buffer_weights = (2 * w_bytes) > (8 << 20)

    def res_spec(shape):
        if single_buffer_weights:
            return pl.BlockSpec(shape, lambda i: (0, 0), pipeline_mode=pl.Buffered(1))
        return pl.BlockSpec(shape, lambda i: (0, 0))

    # ---- advisory cost estimate -------------------------------------------------------------
    flops = 2 * B * ((Db + Dx) * H + H * 2 * O)
    bytes_accessed = B * bytes_per_row + w_bytes
    cost = pl.CostEstimate(flops=flops, transcendentals=0, bytes_accessed=bytes_accessed)

    mu, logvar = pl.pallas_call(
        _cge_kernel,
        out_shape=(jax.ShapeDtypeStruct((B, O), out_dtype),
                   jax.ShapeDtypeStruct((B, O), out_dtype)),
        grid=grid,
        in_specs=[
            act_spec(Db), act_spec(Dx),
            res_spec((Db, H)), res_spec((Dx, H)), res_spec((1, H)),
            res_spec((H, O2)), res_spec((1, O2)),
        ],
        out_specs=(pl.BlockSpec((TB, O), lambda i: (i, 0)),
                   pl.BlockSpec((TB, O), lambda i: (i, 0))),
        compiler_params=pltpu.CompilerParams(
            dimension_semantics=("parallel",),   # batch tiles independent (megacore on v7x)
        ),
        cost_estimate=cost,
    )(b0, x1,
      prepared["w1b"], prepared["w1x"], prepared["b1"],
      prepared["w_heads"], prepared["b_heads"])

    return mu, logvar


def init_params(key, input_dim_b0, input_dim_x, hidden_dim, output_dim):
    ks = jax.random.split(key, 6)
    din = input_dim_b0 + input_dim_x

    # deterministic uniform init mimicking PyTorch Linear default bounds
    def lin(kw, kb, fan_in, fan_out):
        bound = 1.0 / jnp.sqrt(fan_in)
        w = jax.random.uniform(kw, (fan_in, fan_out), jnp.float32, -bound, bound)
        b = jax.random.uniform(kb, (fan_out,), jnp.float32, -bound, bound)
        return w, b

    w1, b1 = lin(ks[0], ks[1], din, hidden_dim)
    w_mu, b_mu = lin(ks[2], ks[3], hidden_dim, output_dim)
    w_lv, b_lv = lin(ks[4], ks[5], hidden_dim, output_dim)
    return {"w1": w1, "b1": b1, "w_mu": w_mu, "b_mu": b_mu,
            "w_logvar": w_lv, "b_logvar": b_lv}


def reference(b0, x1, p):
    combined = jnp.concatenate([b0, x1], axis=-1)
    h = jnp.maximum(combined @ p["w1"] + p["b1"], 0.0)
    return h @ p["w_mu"] + p["b_mu"], h @ p["w_logvar"] + p["b_logvar"]


if __name__ == "__main__":
    key = jax.random.PRNGKey(0)
    k_b0, k_x1, k_p = jax.random.split(key, 3)

    batch, input_dim_b0, input_dim_x, hidden_dim, output_dim = 8, 16, 16, 32, 8
    b0 = jax.random.normal(k_b0, (batch, input_dim_b0), jnp.float32)
    x1 = jax.random.normal(k_x1, (batch, input_dim_x), jnp.float32)

    params = init_params(k_p, input_dim_b0, input_dim_x, hidden_dim, output_dim)
    prepared = prepare_params(params, input_dim_b0)   # one-time, outside the hot path

    mu, logvar = conditional_gaussian_estimator(b0, x1, prepared)
    jax.block_until_ready((mu, logvar))

    mu_ref, logvar_ref = reference(b0, x1, params)    # f32 reference
    # bf16 operands with f32 accumulation -> looser tolerance vs the f32 reference.
    assert mu.shape == mu_ref.shape and logvar.shape == logvar_ref.shape
    assert jnp.allclose(mu, mu_ref, atol=5e-2, rtol=5e-2), "mu mismatch"
    assert jnp.allclose(logvar, logvar_ref, atol=5e-2, rtol=5e-2), "logvar mismatch"
    print("KERNEL_OK")
</pallas_src>

<mosaic_0001>
module attributes {stable_mosaic.version = 11 : i64} {
  func.func @_cge_kernel(%arg0: i32, %arg1: memref<8x16xf32, #tpu.memory_space<vmem>>, %arg2: memref<8x16xf32, #tpu.memory_space<vmem>>, %arg3: memref<16x32xbf16, #tpu.memory_space<vmem>>, %arg4: memref<16x32xbf16, #tpu.memory_space<vmem>>, %arg5: memref<1x32xf32, #tpu.memory_space<vmem>>, %arg6: memref<32x16xbf16, #tpu.memory_space<vmem>>, %arg7: memref<1x16xf32, #tpu.memory_space<vmem>>, %arg8: memref<8x8xf32, #tpu.memory_space<vmem>>, %arg9: memref<8x8xf32, #tpu.memory_space<vmem>>) attributes {dimension_semantics = [#tpu.dimension_semantics<parallel>], iteration_bounds = array<i64: 1>, scalar_prefetch = 0 : i64, scratch_operands = 0 : i64, tpu.core_type = #tpu.core_type<tc>, window_params = [{transform_indices = @transform_0, window_bounds = array<i64: 8, 16>}, {transform_indices = @transform_1, window_bounds = array<i64: 8, 16>}, {pipeline_mode = #tpu.pipeline_mode<synchronous>, transform_indices = @transform_2, window_bounds = array<i64: 16, 32>}, {pipeline_mode = #tpu.pipeline_mode<synchronous>, transform_indices = @transform_3, window_bounds = array<i64: 16, 32>}, {pipeline_mode = #tpu.pipeline_mode<synchronous>, transform_indices = @transform_4, window_bounds = array<i64: 1, 32>}, {pipeline_mode = #tpu.pipeline_mode<synchronous>, transform_indices = @transform_5, window_bounds = array<i64: 32, 16>}, {pipeline_mode = #tpu.pipeline_mode<synchronous>, transform_indices = @transform_6, window_bounds = array<i64: 1, 16>}, {transform_indices = @transform_7, window_bounds = array<i64: 8, 8>}, {transform_indices = @transform_8, window_bounds = array<i64: 8, 8>}]} {
    %c0 = arith.constant 0 : index
    %c0_0 = arith.constant 0 : index
    %0 = vector.load %arg1[%c0, %c0_0] : memref<8x16xf32, #tpu.memory_space<vmem>>, vector<8x16xf32>
    %1 = arith.truncf %0 : vector<8x16xf32> to vector<8x16xbf16>
    %c0_1 = arith.constant 0 : index
    %c0_2 = arith.constant 0 : index
    %2 = vector.load %arg2[%c0_1, %c0_2] : memref<8x16xf32, #tpu.memory_space<vmem>>, vector<8x16xf32>
    %3 = arith.truncf %2 : vector<8x16xf32> to vector<8x16xbf16>
    %c0_3 = arith.constant 0 : index
    %c0_4 = arith.constant 0 : index
    %4 = vector.load %arg3[%c0_3, %c0_4] : memref<16x32xbf16, #tpu.memory_space<vmem>>, vector<16x32xbf16>
    %cst = arith.constant dense<0.000000e+00> : vector<8x32xf32>
    %5 = tpu.matmul %1, %4, %cst {dimension_numbers = #tpu.dot_dimension_numbers<[1], [0], [0], [1], [0, 0, 1, 1], [], []>} : vector<8x16xbf16>, vector<16x32xbf16>, vector<8x32xf32> -> vector<8x32xf32>
    %c0_5 = arith.constant 0 : index
    %c0_6 = arith.constant 0 : index
    %6 = vector.load %arg4[%c0_5, %c0_6] : memref<16x32xbf16, #tpu.memory_space<vmem>>, vector<16x32xbf16>
    %cst_7 = arith.constant dense<0.000000e+00> : vector<8x32xf32>
    %7 = tpu.matmul %3, %6, %cst_7 {dimension_numbers = #tpu.dot_dimension_numbers<[1], [0], [0], [1], [0, 0, 1, 1], [], []>} : vector<8x16xbf16>, vector<16x32xbf16>, vector<8x32xf32> -> vector<8x32xf32>
    %8 = arith.addf %5, %7 : vector<8x32xf32>
    %c0_8 = arith.constant 0 : index
    %c0_9 = arith.constant 0 : index
    %9 = vector.load %arg5[%c0_8, %c0_9] : memref<1x32xf32, #tpu.memory_space<vmem>>, vector<1x32xf32>
    %10 = vector.broadcast %9 : vector<1x32xf32> to vector<8x32xf32>
    %11 = arith.addf %8, %10 : vector<8x32xf32>
    %12 = arith.truncf %11 : vector<8x32xf32> to vector<8x32xbf16>
    %cst_10 = arith.constant 0.000000e+00 : bf16
    %13 = vector.broadcast %cst_10 : bf16 to vector<8x32xbf16>
    %14 = arith.maximumf %12, %13 : vector<8x32xbf16>
    %c0_11 = arith.constant 0 : index
    %c0_12 = arith.constant 0 : index
    %15 = vector.load %arg6[%c0_11, %c0_12] : memref<32x16xbf16, #tpu.memory_space<vmem>>, vector<32x16xbf16>
    %cst_13 = arith.constant dense<0.000000e+00> : vector<8x16xf32>
    %16 = tpu.matmul %14, %15, %cst_13 {dimension_numbers = #tpu.dot_dimension_numbers<[1], [0], [0], [1], [0, 0, 1, 1], [], []>} : vector<8x32xbf16>, vector<32x16xbf16>, vector<8x16xf32> -> vector<8x16xf32>
    %c0_14 = arith.constant 0 : index
    %c0_15 = arith.constant 0 : index
    %17 = vector.load %arg7[%c0_14, %c0_15] : memref<1x16xf32, #tpu.memory_space<vmem>>, vector<1x16xf32>
    %18 = vector.broadcast %17 : vector<1x16xf32> to vector<8x16xf32>
    %19 = arith.addf %16, %18 : vector<8x16xf32>
    %20 = vector.extract_strided_slice %19 {offsets = [0, 0], sizes = [8, 8], strides = [1, 1]} : vector<8x16xf32> to vector<8x8xf32>
    %c0_16 = arith.constant 0 : index
    %c0_17 = arith.constant 0 : index
    %21 = vector.load %arg8[%c0_16, %c0_17] : memref<8x8xf32, #tpu.memory_space<vmem>>, vector<8x8xf32>
    tpu.vector_store %arg8[%c0_16, %c0_17], %20 {strides = array<i32>} : memref<8x8xf32, #tpu.memory_space<vmem>>, vector<8x8xf32>,
    %22 = vector.extract_strided_slice %19 {offsets = [0, 8], sizes = [8, 8], strides = [1, 1]} : vector<8x16xf32> to vector<8x8xf32>
    %c0_18 = arith.constant 0 : index
    %c0_19 = arith.constant 0 : index
    %23 = vector.load %arg9[%c0_18, %c0_19] : memref<8x8xf32, #tpu.memory_space<vmem>>, vector<8x8xf32>
    tpu.vector_store %arg9[%c0_18, %c0_19], %22 {strides = array<i32>} : memref<8x8xf32, #tpu.memory_space<vmem>>, vector<8x8xf32>,
    return
  }
  func.func @transform_0(%arg0: i32) -> (i32, i32) {
    %c0_i32 = arith.constant 0 : i32
    %c0_i32_0 = arith.constant 0 : i32
    return %arg0, %c0_i32 : i32, i32
  }
  func.func @transform_1(%arg0: i32) -> (i32, i32) {
    %c0_i32 = arith.constant 0 : i32
    %c0_i32_0 = arith.constant 0 : i32
    return %arg0, %c0_i32 : i32, i32
  }
  func.func @transform_2(%arg0: i32) -> (i32, i32) {
    %c0_i32 = arith.constant 0 : i32
    %c0_i32_0 = arith.constant 0 : i32
    %c0_i32_1 = arith.constant 0 : i32
    return %c0_i32, %c0_i32_0 : i32, i32
  }
  func.func @transform_3(%arg0: i32) -> (i32, i32) {
    %c0_i32 = arith.constant 0 : i32
    %c0_i32_0 = arith.constant 0 : i32
    %c0_i32_1 = arith.constant 0 : i32
    return %c0_i32, %c0_i32_0 : i32, i32
  }
  func.func @transform_4(%arg0: i32) -> (i32, i32) {
    %c0_i32 = arith.constant 0 : i32
    %c0_i32_0 = arith.constant 0 : i32
    %c0_i32_1 = arith.constant 0 : i32
    return %c0_i32, %c0_i32_0 : i32, i32
  }
  func.func @transform_5(%arg0: i32) -> (i32, i32) {
    %c0_i32 = arith.constant 0 : i32
    %c0_i32_0 = arith.constant 0 : i32
    %c0_i32_1 = arith.constant 0 : i32
    return %c0_i32, %c0_i32_0 : i32, i32
  }
  func.func @transform_6(%arg0: i32) -> (i32, i32) {
    %c0_i32 = arith.constant 0 : i32
    %c0_i32_0 = arith.constant 0 : i32
    %c0_i32_1 = arith.constant 0 : i32
    return %c0_i32, %c0_i32_0 : i32, i32
  }
  func.func @transform_7(%arg0: i32) -> (i32, i32) {
    %c0_i32 = arith.constant 0 : i32
    %c0_i32_0 = arith.constant 0 : i32
    return %arg0, %c0_i32 : i32, i32
  }
  func.func @transform_8(%arg0: i32) -> (i32, i32) {
    %c0_i32 = arith.constant 0 : i32
    %c0_i32_0 = arith.constant 0 : i32
    return %arg0, %c0_i32 : i32, i32
  }
}

</mosaic_0001>

<llo_original>
// kernel: conditional_gaussian_estimator.1
$region0: #{conditional_gaussian_estimator.1}
  #allocation0 [shape = 'u32[]', space=smem, size = 0x4, offset = 0x4, fixed_abs, tag = 'smem constant byte address 0x4 - core index']
  #allocation1 [shape = 'u32[144,128]{1,0:T(1,128)}', space=vmem, size = 0x12000, scoped, tag = 'internal scratch']
  %s0 = inlined_call_operand.vmem [shape: f32[8,16], index: 0, kind: input, shape index: {}]
  %s1 = inlined_call_operand.vmem [shape: f32[8,16], index: 1, kind: input, shape index: {}]
  %s2 = inlined_call_operand.vmem [shape: bf16[16,32], index: 2, kind: input, shape index: {}]
  %s3 = inlined_call_operand.vmem [shape: bf16[16,32], index: 3, kind: input, shape index: {}]
  %s4 = inlined_call_operand.vmem [shape: f32[1,32], index: 4, kind: input, shape index: {}]
  %s5 = inlined_call_operand.vmem [shape: bf16[32,16], index: 5, kind: input, shape index: {}]
  %s6 = inlined_call_operand.vmem [shape: f32[1,16], index: 6, kind: input, shape index: {}]
  %s7 = inlined_call_operand.hbm [shape: f32[8,8], index: 7, kind: output, shape index: {0}]
  %s8 = inlined_call_operand.hbm [shape: f32[8,8], index: 8, kind: output, shape index: {1}]
  %9 = xla_tuple %s7, %s8
  %s10 = sld [smem:[#allocation0]]
  $region46: #{conditional_gaussian_estimator.1} parent=0
    _
  %s12 = ssub.s32 1, %s10
  %s13 = scalar_select 0, %s12, %s10
  $region1: #{conditional_gaussian_estimator.1} parent=0
    #allocation2 [shape = 'u8[4096]{0}', space=vmem, size = 0x1000, scoped, tag = 'output window, operand 0, single buffered']
    #allocation3 [shape = 's32[1]{0}', space=sflag, size = 0x4, scoped, tag = 'scoped memory for conditional_gaussian_estimator.1']
    #allocation4 [shape = 'u8[4096]{0}', space=vmem, size = 0x1000, scoped, tag = 'output window, operand 1, single buffered']
    #allocation5 [shape = 's32[1]{0}', space=sflag, size = 0x4, scoped, tag = 'scoped memory for conditional_gaussian_estimator.1']
    %14 = vsyncpa [#allocation3], 0
    %15 = vsyncpa [#allocation5], 0
    // Predicated region
    $region2: #{conditional_gaussian_estimator.1} parent=1 // pred_check
      _
    $region3: #{conditional_gaussian_estimator.1} parent=1 // pred_check_branch
      %17 = sbr.rel (0) target = $region5
    $region4: #{conditional_gaussian_estimator.1} parent=1 // pred_region
      _
    $region5: #{conditional_gaussian_estimator.1} parent=1 // pred_fallthru
      _
    // Predicated region
    $region6: #{conditional_gaussian_estimator.1} parent=1 // pred_check
      _
    $region7: #{conditional_gaussian_estimator.1} parent=1 // pred_check_branch
      %19 = sbr.rel (0) target = $region9
    $region8: #{conditional_gaussian_estimator.1} parent=1 // pred_region
      _
    $region9: #{conditional_gaussian_estimator.1} parent=1 // pred_fallthru
      _
    // Predicated region
    $region10: #{conditional_gaussian_estimator.1} parent=1 // pred_check
      _
    $region11: #{conditional_gaussian_estimator.1} parent=1 // pred_check_branch
      %21 = sbr.rel (0) target = $region13
    $region12: #{conditional_gaussian_estimator.1} parent=1 // pred_region
      _
    $region13: #{conditional_gaussian_estimator.1} parent=1 // pred_fallthru
      _
    // Predicated region
    $region14: #{conditional_gaussian_estimator.1} parent=1 // pred_check
      _
    $region15: #{conditional_gaussian_estimator.1} parent=1 // pred_check_branch
      %23 = sbr.rel (0) target = $region17
    $region16: #{conditional_gaussian_estimator.1} parent=1 // pred_region
      _
    $region17: #{conditional_gaussian_estimator.1} parent=1 // pred_fallthru
      _
    // Predicated region
    $region18: #{conditional_gaussian_estimator.1} parent=1 // pred_check
      _
    $region19: #{conditional_gaussian_estimator.1} parent=1 // pred_check_branch
      %25 = sbr.rel (0) target = $region21
    $region20: #{conditional_gaussian_estimator.1} parent=1 // pred_region
      _
    $region21: #{conditional_gaussian_estimator.1} parent=1 // pred_fallthru
      _
    // Predicated region
    $region22: #{conditional_gaussian_estimator.1} parent=1 // pred_check
      _
    $region23: #{conditional_gaussian_estimator.1} parent=1 // pred_check_branch
      %27 = sbr.rel (0) target = $region25
    $region24: #{conditional_gaussian_estimator.1} parent=1 // pred_region
      _
    $region25: #{conditional_gaussian_estimator.1} parent=1 // pred_fallthru
      _
    // Predicated region
    $region26: #{conditional_gaussian_estimator.1} parent=1 // pred_check
      _
    $region27: #{conditional_gaussian_estimator.1} parent=1 // pred_check_branch
      %29 = sbr.rel (0) target = $region29
    $region28: #{conditional_gaussian_estimator.1} parent=1 // pred_region
      _
    $region29: #{conditional_gaussian_estimator.1} parent=1 // pred_fallthru
      _
    %v31 = vld [vmem:[%s0] sm:$0xff]
    %v32 = vpack.c.bf16 %v31, %v31
    %v33 = vld [vmem:[%s1] sm:$0xff]
    %v34 = vpack.c.bf16 %v33, %v33
    %v35 = vld [vmem:[%s2] sm:$0xf]
    %v36 = vld [vmem:[%s2 + $0x4] sm:$0xf]
    %v37 = vld [vmem:[%s3] sm:$0xf]
    %v38 = vld [vmem:[%s3 + $0x4] sm:$0xf]
    %v41 = vunpack.c.l.b16 %v37
    %v42 = vunpack.c.l.b16 %v38
    %v43 = vpack.c.b16 %v42, %v41
    %vm45 = vcmask 130048
    %v47 = vsel %vm45, %v34, 0
    %49 = vmatprep.subr.bf16.mxu0 0
    %50 = vmatpush1.bf16.msra.mxu0 %v43
    %51 = vmatprep.subr.bf16.mxu0 0
    %52 = vmatpush1.bf16.msra.mxu0 0
    %53 = vmatprep.subr.bf16.mxu0 0
    %54 = vmatpush1.bf16.msra.mxu0 0
    %55 = vmatprep.subr.bf16.mxu0 0
    %56 = vmatpush1.bf16.msra.mxu0 0
    %57 = vmatprep.subr.bf16.mxu0 0
    %58 = vmatpush1.bf16.msra.mxu0 0
    %59 = vmatprep.subr.bf16.mxu0 0
    %60 = vmatpush1.bf16.msra.mxu0 0
    %61 = vmatprep.subr.bf16.mxu0 0
    %62 = vmatpush1.bf16.msra.mxu0 0
    %63 = vmatprep.subr.bf16.mxu0 0
    %64 = vmatpush1.bf16.msra.mxu0 0
    %65 = vmatprep.subr.bf16.mxu0 0
    %66 = vmatpush1.bf16.msra.mxu0 0
    %67 = vmatprep.subr.bf16.mxu0 0
    %68 = vmatpush1.bf16.msra.mxu0 0
    %69 = vmatprep.subr.bf16.mxu0 0
    %70 = vmatpush1.bf16.msra.mxu0 0
    %71 = vmatprep.subr.bf16.mxu0 0
    %72 = vmatpush1.bf16.msra.mxu0 0
    %73 = vmatprep.subr.bf16.mxu0 0
    %74 = vmatpush1.bf16.msra.mxu0 0
    %75 = vmatprep.subr.bf16.mxu0 0
    %76 = vmatpush1.bf16.msra.mxu0 0
    %77 = vmatprep.subr.bf16.mxu0 0
    %78 = vmatpush1.bf16.msra.mxu0 0
    %79 = vmatprep.subr.bf16.mxu0 0
    %80 = vmatpush1.bf16.msra.mxu0 0
    %81 = vmatprep.mubr.bf16.mxu0 0
    %82 = vmatmul.mubr.bf16.gmra.mrb[0].mxu0 %v47
    %v83 = vpop.f32.mrb[0].mxu0
    %v84 = vadd.f32 0.0, %v83
    %v85 = vpop.f32.mrb[0].mxu0
    %v86 = vpop.f32.mrb[0].mxu0
    %v87 = vpop.f32.mrb[0].mxu0
    %88 = vdwg.mxu0
    %v91 = vunpack.c.l.b16 %v35
    %v92 = vunpack.c.l.b16 %v36
    %v93 = vpack.c.b16 %v92, %v91
    %v96 = vsel %vm45, %v32, 0
    %98 = vmatprep.subr.bf16.mxu0 0
    %99 = vmatpush1.bf16.msra.mxu0 %v93
    %100 = vmatprep.subr.bf16.mxu0 0
    %101 = vmatpush1.bf16.msra.mxu0 0
    %102 = vmatprep.subr.bf16.mxu0 0
    %103 = vmatpush1.bf16.msra.mxu0 0
    %104 = vmatprep.subr.bf16.mxu0 0
    %105 = vmatpush1.bf16.msra.mxu0 0
    %106 = vmatprep.subr.bf16.mxu0 0
    %107 = vmatpush1.bf16.msra.mxu0 0
    %108 = vmatprep.subr.bf16.mxu0 0
    %109 = vmatpush1.bf16.msra.mxu0 0
    %110 = vmatprep.subr.bf16.mxu0 0
    %111 = vmatpush1.bf16.msra.mxu0 0
    %112 = vmatprep.subr.bf16.mxu0 0
    %113 = vmatpush1.bf16.msra.mxu0 0
    %114 = vmatprep.subr.bf16.mxu0 0
    %115 = vmatpush1.bf16.msra.mxu0 0
    %116 = vmatprep.subr.bf16.mxu0 0
    %117 = vmatpush1.bf16.msra.mxu0 0
    %118 = vmatprep.subr.bf16.mxu0 0
    %119 = vmatpush1.bf16.msra.mxu0 0
    %120 = vmatprep.subr.bf16.mxu0 0
    %121 = vmatpush1.bf16.msra.mxu0 0
    %122 = vmatprep.subr.bf16.mxu0 0
    %123 = vmatpush1.bf16.msra.mxu0 0
    %124 = vmatprep.subr.bf16.mxu0 0
    %125 = vmatpush1.bf16.msra.mxu0 0
    %126 = vmatprep.subr.bf16.mxu0 0
    %127 = vmatpush1.bf16.msra.mxu0 0
    %128 = vmatprep.subr.bf16.mxu0 0
    %129 = vmatpush1.bf16.msra.mxu0 0
    %130 = vmatprep.mubr.bf16.mxu0 0
    %131 = vmatmul.mubr.bf16.gmra.mrb[0].mxu0 %v96
    %v132 = vpop.f32.mrb[0].mxu0
    %v133 = vadd.f32 %v84, %v132
    %v134 = vpop.f32.mrb[0].mxu0
    %v135 = vpop.f32.mrb[0].mxu0
    %v136 = vpop.f32.mrb[0].mxu0
    %137 = vdwg.mxu0
    %v138 = vld [vmem:[%s4] sm:$0x1]
    %v140 = vlaneseq
    %v141 = vshrl.u32 %v140, 7
    %v142 = vsub.s32 0, %v141
    %v143 = vrot.slane %v138, %v142
    %v145 = vadd.f32 %v133, %v143
    %v146 = vpack.c.bf16 %v145, %v145
    %v147 = vmax.bf16 %v146, 0
    %v148 = vld [vmem:[%s5] sm:$0xf]
    %v149 = vld [vmem:[%s5 + $0x4] sm:$0xf]
    %v150 = vld [vmem:[%s5 + $0x8] sm:$0xf]
    %v151 = vld [vmem:[%s5 + $0xc] sm:$0xf]
    %v152 = vld [vmem:[%s6] sm:$0x1]
    %v154 = vlaneseq
    %v155 = vshrl.u32 %v154, 7
    %v156 = vsub.s32 0, %v155
    %v157 = vrot.slane %v152, %v156
    %v163 = vunpack.c.l.b16 %v148
    %v164 = vunpack.c.l.b16 %v149
    %v165 = vunpack.c.l.b16 %v150
    %v166 = vunpack.c.l.b16 %v151
    %v167 = vpack.c.b16 %v164, %v163
    %v168 = vpack.c.b16 %v166, %v165
    %vm171 = vcmask 261120
    %v173 = vsel %vm171, %v147, 0
    %175 = vmatprep.subr.bf16.mxu0 0
    %176 = vmatpush1.bf16.msra.mxu0 %v167
    %177 = vmatprep.subr.bf16.mxu0 0
    %178 = vmatpush1.bf16.msra.mxu0 %v168
    %179 = vmatprep.subr.bf16.mxu0 0
    %180 = vmatpush1.bf16.msra.mxu0 0
    %181 = vmatprep.subr.bf16.mxu0 0
    %182 = vmatpush1.bf16.msra.mxu0 0
    %183 = vmatprep.subr.bf16.mxu0 0
    %184 = vmatpush1.bf16.msra.mxu0 0
    %185 = vmatprep.subr.bf16.mxu0 0
    %186 = vmatpush1.bf16.msra.mxu0 0
    %187 = vmatprep.subr.bf16.mxu0 0
    %188 = vmatpush1.bf16.msra.mxu0 0
    %189 = vmatprep.subr.bf16.mxu0 0
    %190 = vmatpush1.bf16.msra.mxu0 0
    %191 = vmatprep.subr.bf16.mxu0 0
    %192 = vmatpush1.bf16.msra.mxu0 0
    %193 = vmatprep.subr.bf16.mxu0 0
    %194 = vmatpush1.bf16.msra.mxu0 0
    %195 = vmatprep.subr.bf16.mxu0 0
    %196 = vmatpush1.bf16.msra.mxu0 0
    %197 = vmatprep.subr.bf16.mxu0 0
    %198 = vmatpush1.bf16.msra.mxu0 0
    %199 = vmatprep.subr.bf16.mxu0 0
    %200 = vmatpush1.bf16.msra.mxu0 0
    %201 = vmatprep.subr.bf16.mxu0 0
    %202 = vmatpush1.bf16.msra.mxu0 0
    %203 = vmatprep.subr.bf16.mxu0 0
    %204 = vmatpush1.bf16.msra.mxu0 0
    %205 = vmatprep.subr.bf16.mxu0 0
    %206 = vmatpush1.bf16.msra.mxu0 0
    %207 = vmatprep.mubr.bf16.mxu0 0
    %208 = vmatmul.mubr.bf16.gmra.mrb[0].mxu0 %v173
    %v209 = vpop.f32.mrb[0].mxu0
    %v210 = vadd.f32 %v157, %v209
    %v211 = vpop.f32.mrb[0].mxu0
    %v212 = vpop.f32.mrb[0].mxu0
    %v213 = vpop.f32.mrb[0].mxu0
    %214 = vdwg.mxu0
    %vm215 = vcmask 64512
    %216 = vst.msk [vmem:[#allocation2] sm:$0xff] %vm215, %v210
    %218 = vrot.lane.b32.xlu0 %v210, 120
    %v219 = vpop.permute.xlu0 %218
    %221 = vst.msk [vmem:[#allocation4] sm:$0xff] %vm215, %v219
    // Predicated region
    $region30: #{conditional_gaussian_estimator.1} parent=1 // pred_check
      _
    $region31: #{conditional_gaussian_estimator.1} parent=1 // pred_check_branch
      %223 = sbr.rel (0) target = $region33
    $region32: #{conditional_gaussian_estimator.1} parent=1 // pred_region
      %s225 = ssub.s32 128, 128
      %226 = vsyncadd [#allocation3], %s225
      %s228 = sshll.u32 [#allocation2], 4
      %s229 = int_to_ptr.vmem [resolvable:$true] %s228
      %231 = dma.vmem_to_hbm [thread:$0]  %s229, 128, %s7, [#allocation3]
    $region33: #{conditional_gaussian_estimator.1} parent=1 // pred_fallthru
      _
    // Predicated region
    $region34: #{conditional_gaussian_estimator.1} parent=1 // pred_check
      _
    $region35: #{conditional_gaussian_estimator.1} parent=1 // pred_check_branch
      %233 = sbr.rel (0) target = $region37
    $region36: #{conditional_gaussian_estimator.1} parent=1 // pred_region
      %s235 = ssub.s32 128, 128
      %236 = vsyncadd [#allocation5], %s235
      %s238 = sshll.u32 [#allocation4], 4
      %s239 = int_to_ptr.vmem [resolvable:$true] %s238
      %241 = dma.vmem_to_hbm [thread:$0]  %s239, 128, %s8, [#allocation5]
    $region37: #{conditional_gaussian_estimator.1} parent=1 // pred_fallthru
      _
    // Predicated region
    $region38: #{conditional_gaussian_estimator.1} parent=1 // pred_check
      _
    $region39: #{conditional_gaussian_estimator.1} parent=1 // pred_check_branch
      %243 = sbr.rel (0) target = $region41
    $region40: #{conditional_gaussian_estimator.1} parent=1 // pred_region
      %244 = dma.done [#allocation3], 128
    $region41: #{conditional_gaussian_estimator.1} parent=1 // pred_fallthru
      _
    // Predicated region
    $region42: #{conditional_gaussian_estimator.1} parent=1 // pred_check
      _
    $region43: #{conditional_gaussian_estimator.1} parent=1 // pred_check_branch
      %246 = sbr.rel (0) target = $region45
    $region44: #{conditional_gaussian_estimator.1} parent=1 // pred_region
      %247 = dma.done [#allocation5], 128
    $region45: #{conditional_gaussian_estimator.1} parent=1 // pred_fallthru
      _
    %248 = vsyncpa [#allocation3], 1
    %249 = vsyncpa [#allocation5], 1

</llo_original>
